<compile_context>
chip_gen: v7x
topology: tpu7x:2x2x1
jax: 0.10.0
libtpu: 0.0.40
codegen_flags: <defaults>
</compile_context>

<pallas_src>
import jax
import jax.numpy as jnp
from jax.experimental import pallas as pl
from jax.experimental.pallas import tpu as pltpu


def _proj_log_softmax_kernel(x_ref, w_ref, b_ref, o_ref):
    # x_ref: (RT, D)   w_ref: (D, V)   b_ref: (1, V)   o_ref: (RT, V)
    logits = jnp.dot(x_ref[...], w_ref[...], preferred_element_type=jnp.float32)
    logits = logits + b_ref[...].astype(jnp.float32)          # broadcast bias
    m = jnp.max(logits, axis=-1, keepdims=True)                # stable log_softmax
    shifted = logits - m
    lse = jnp.log(jnp.sum(jnp.exp(shifted), axis=-1, keepdims=True))
    o_ref[...] = (shifted - lse).astype(o_ref.dtype)


def _round_up(x, m):
    return ((x + m - 1) // m) * m


def _choose_row_tile(n_rows, vocab_size, requested):
    # Cap so the f32 (rt, V) output/logits block stays ~<= 8 MiB.
    cap = max(8, (8 * 1024 * 1024) // (4 * max(vocab_size, 1)))
    rt = max(8, min(int(requested), cap))
    rt = max(8, (rt // 8) * 8)                                  # sublane multiple
    # Keep at least 2 grid steps when possible (v7x: 2 TensorCores per chip).
    half8 = _round_up(max(-(-n_rows // 2), 1), 8)
    rt = max(8, min(rt, half8))
    return rt


def projection_log_softmax(x, weight, bias, *, row_tile=1024):
    """log_softmax(x @ weight + bias, axis=-1).

    x:      (..., d_model)
    weight: (d_model, vocab_size)   (transposed vs. torch's (vocab, d_model))
    bias:   (vocab_size,)
    """
    orig_lead = x.shape[:-1]
    d = x.shape[-1]
    v = weight.shape[-1]
    assert weight.shape[0] == d and bias.shape == (v,)

    x2 = x.reshape(-1, d)
    n = x2.shape[0]

    rt = _choose_row_tile(n, v, row_tile)
    n_pad = _round_up(n, rt)
    if n_pad != n:
        x2 = jnp.pad(x2, ((0, n_pad - n), (0, 0)))              # padded rows sliced off below

    b2 = bias.reshape(1, v)
    grid = (n_pad // rt,)

    out = pl.pallas_call(
        _proj_log_softmax_kernel,
        out_shape=jax.ShapeDtypeStruct((n_pad, v), x.dtype),
        grid_spec=pltpu.PrefetchScalarGridSpec(
            num_scalar_prefetch=0,
            grid=grid,
            in_specs=[
                pl.BlockSpec((rt, d), lambda i: (i, 0)),        # x rows
                pl.BlockSpec((d, v), lambda i: (0, 0)),         # full weight (constant block)
                pl.BlockSpec((1, v), lambda i: (0, 0)),         # bias
            ],
            out_specs=pl.BlockSpec((rt, v), lambda i: (i, 0)),
        ),
        compiler_params=pltpu.CompilerParams(
            dimension_semantics=("parallel",),
            # Above the 16/32 MiB scoped defaults (v5e/v6e) yet safe on v7x's 64 MiB VMEM.
            vmem_limit_bytes=48 * 1024 * 1024,
        ),
    )(x2, weight, b2)

    return out[:n].reshape(orig_lead + (v,))


class ProjectionLayer:
    """JAX/Pallas port of the PyTorch ProjectionLayer (Linear + log_softmax)."""

    def __init__(self, d_model, vocab_size, key, dtype=jnp.float32):
        kw, kb = jax.random.split(key)
        bound = 1.0 / (d_model ** 0.5)                          # nn.Linear default init scale
        # weight stored as (d_model, vocab_size) so the kernel runs x @ W directly
        self.weight = jax.random.uniform(kw, (d_model, vocab_size), dtype, -bound, bound)
        self.bias = jax.random.uniform(kb, (vocab_size,), dtype, -bound, bound)

    def __call__(self, x):
        return projection_log_softmax(x, self.weight, self.bias)


if __name__ == "__main__":
    key = jax.random.PRNGKey(0)
    batch, seq, d_model, vocab_size = 2, 8, 64, 512             # vocab multiple of 128 (lane-dense)
    kx, kp = jax.random.split(key)
    x = jax.random.normal(kx, (batch, seq, d_model), dtype=jnp.float32)

    layer = ProjectionLayer(d_model, vocab_size, kp)
    out = jax.block_until_ready(layer(x))

    # Reference (plain JAX, matches torch.log_softmax(nn.Linear(x)) semantics)
    ref = jax.nn.log_softmax(
        jnp.einsum("bsd,dv->bsv", x, layer.weight) + layer.bias, axis=-1)

    assert out.shape == (batch, seq, vocab_size) and out.dtype == x.dtype
    err = float(jnp.max(jnp.abs(out - ref)))
    assert err < 1e-4, f"max abs err {err}"
    print("KERNEL_OK")
</pallas_src>

<mosaic_0001>
module attributes {stable_mosaic.version = 11 : i64} {
  func.func @_proj_log_softmax_kernel(%arg0: i32, %arg1: memref<8x64xf32, #tpu.memory_space<vmem>>, %arg2: memref<64x512xf32, #tpu.memory_space<vmem>>, %arg3: memref<1x512xf32, #tpu.memory_space<vmem>>, %arg4: memref<8x512xf32, #tpu.memory_space<vmem>>) attributes {dimension_semantics = [#tpu.dimension_semantics<parallel>], iteration_bounds = array<i64: 2>, scalar_prefetch = 0 : i64, scratch_operands = 0 : i64, tpu.core_type = #tpu.core_type<tc>, window_params = [{transform_indices = @transform_0, window_bounds = array<i64: 8, 64>}, {pipeline_mode = #tpu.pipeline_mode<synchronous>, transform_indices = @transform_1, window_bounds = array<i64: 64, 512>}, {pipeline_mode = #tpu.pipeline_mode<synchronous>, transform_indices = @transform_2, window_bounds = array<i64: 1, 512>}, {transform_indices = @transform_3, window_bounds = array<i64: 8, 512>}]} {
    %c0 = arith.constant 0 : index
    %c0_0 = arith.constant 0 : index
    %0 = vector.load %arg1[%c0, %c0_0] : memref<8x64xf32, #tpu.memory_space<vmem>>, vector<8x64xf32>
    %c0_1 = arith.constant 0 : index
    %c0_2 = arith.constant 0 : index
    %1 = vector.load %arg2[%c0_1, %c0_2] : memref<64x512xf32, #tpu.memory_space<vmem>>, vector<64x512xf32>
    %cst = arith.constant dense<0.000000e+00> : vector<8x512xf32>
    %2 = tpu.matmul %0, %1, %cst {dimension_numbers = #tpu.dot_dimension_numbers<[1], [0], [0], [1], [0, 0, 1, 1], [], []>} : vector<8x64xf32>, vector<64x512xf32>, vector<8x512xf32> -> vector<8x512xf32>
    %c0_3 = arith.constant 0 : index
    %c0_4 = arith.constant 0 : index
    %3 = vector.load %arg3[%c0_3, %c0_4] : memref<1x512xf32, #tpu.memory_space<vmem>>, vector<1x512xf32>
    %4 = vector.broadcast %3 : vector<1x512xf32> to vector<8x512xf32>
    %5 = arith.addf %2, %4 : vector<8x512xf32>
    %cst_5 = arith.constant dense<0xFF800000> : vector<8xf32>
    %6 = vector.multi_reduction <maximumf>, %5, %cst_5 [1] : vector<8x512xf32> to vector<8xf32>
    %7 = vector.shape_cast %6 : vector<8xf32> to vector<8x1xf32>
    %8 = vector.broadcast %7 : vector<8x1xf32> to vector<8x512xf32>
    %9 = arith.subf %5, %8 : vector<8x512xf32>
    %10 = math.exp %9 : vector<8x512xf32>
    %cst_6 = arith.constant dense<0.000000e+00> : vector<8xf32>
    %11 = vector.multi_reduction <add>, %10, %cst_6 [1] : vector<8x512xf32> to vector<8xf32>
    %12 = vector.shape_cast %11 : vector<8xf32> to vector<8x1xf32>
    %13 = math.log %12 : vector<8x1xf32>
    %14 = vector.broadcast %13 : vector<8x1xf32> to vector<8x512xf32>
    %15 = arith.subf %9, %14 : vector<8x512xf32>
    %c0_7 = arith.constant 0 : index
    %c0_8 = arith.constant 0 : index
    %16 = vector.load %arg4[%c0_7, %c0_8] : memref<8x512xf32, #tpu.memory_space<vmem>>, vector<8x512xf32>
    tpu.vector_store %arg4[%c0_7, %c0_8], %15 {strides = array<i32>} : memref<8x512xf32, #tpu.memory_space<vmem>>, vector<8x512xf32>,
    return
  }
  func.func @transform_0(%arg0: i32) -> (i32, i32) {
    %c0_i32 = arith.constant 0 : i32
    %c0_i32_0 = arith.constant 0 : i32
    return %arg0, %c0_i32 : i32, i32
  }
  func.func @transform_1(%arg0: i32) -> (i32, i32) {
    %c0_i32 = arith.constant 0 : i32
    %c0_i32_0 = arith.constant 0 : i32
    %c0_i32_1 = arith.constant 0 : i32
    return %c0_i32, %c0_i32_0 : i32, i32
  }
  func.func @transform_2(%arg0: i32) -> (i32, i32) {
    %c0_i32 = arith.constant 0 : i32
    %c0_i32_0 = arith.constant 0 : i32
    %c0_i32_1 = arith.constant 0 : i32
    return %c0_i32, %c0_i32_0 : i32, i32
  }
  func.func @transform_3(%arg0: i32) -> (i32, i32) {
    %c0_i32 = arith.constant 0 : i32
    %c0_i32_0 = arith.constant 0 : i32
    return %arg0, %c0_i32 : i32, i32
  }
}

</mosaic_0001>

<llo_original>
// kernel: tpu_custom_call.1
$region0: #{tpu_custom_call.1}
  #allocation0 [shape = 'u32[]', space=smem, size = 0x4, offset = 0x4, fixed_abs, tag = 'smem constant byte address 0x4 - core index']
  #allocation1 [shape = 'u32[144,128]{1,0:T(1,128)}', space=vmem, size = 0x12000, scoped, tag = 'internal scratch']
  %s0 = inlined_call_operand.hbm [shape: f32[16,64], index: 0, kind: input, shape index: {}]
  %s1 = inlined_call_operand.hbm [shape: f32[64,512], index: 1, kind: input, shape index: {}]
  %s2 = inlined_call_operand.vmem [shape: f32[1,512], index: 2, kind: input, shape index: {}]
  %s3 = inlined_call_operand.hbm [shape: f32[16,512], index: 3, kind: output, shape index: {}]
  %s4 = sld [smem:[#allocation0]]
  $region53: #{tpu_custom_call.1} parent=0
    _
  %s6 = ssub.s32 1, %s4
  %s7 = scalar_select 0, %s6, %s4
  $region1: #{tpu_custom_call.1} parent=0
    #allocation2 [shape = 'u8[8192]{0}', space=vmem, size = 0x2000, scoped, tag = 'input window, operand 0']
    #allocation3 [shape = 's32[2]{0}', space=sflag, size = 0x8, scoped, tag = 'scoped memory for tpu_custom_call.1']
    #allocation4 [shape = 's32[2]{0}', space=sflag, size = 0x8, scoped, tag = 'scoped memory for tpu_custom_call.1']
    #allocation5 [shape = 'u8[131072]{0}', space=vmem, size = 0x20000, scoped, tag = 'input window, operand 1, single buffered']
    #allocation6 [shape = 's32[1]{0}', space=sflag, size = 0x4, scoped, tag = 'scoped memory for tpu_custom_call.1']
    #allocation7 [shape = 'u8[32768]{0}', space=vmem, size = 0x8000, scoped, tag = 'output window, operand 0']
    %8 = vsyncpa [#allocation3], 0
    %s9 = scalar_lea.sflag [#allocation3], 1
    %10 = vsyncpa %s9, 0
    %11 = vsyncpa [#allocation6], 0
    %12 = vsyncpa [#allocation4], 0
    %s13 = scalar_lea.sflag [#allocation4], 1
    %14 = vsyncpa %s13, 0
    loop: start=0, step=1, limit=4
    $region2: #{tpu_custom_call.1} parent=1 // loop_pre_header
      _
    $region3: #{tpu_custom_call.1} parent=1 // loop_header
      %s16 = sphi 0, %s20
      %p17 = scmp.ge.s32.totalorder %s16, 4
      %s26 = sphi 0, %s28
      %s29 = sphi 0, %s26
      %s30 = sphi 0, %s29
      %s46 = sphi 0, %s30
      %s50 = sphi 0, %s50
      %s52 = sphi 0, %s50
      %s53 = sphi 0, %s52
      %s67 = sphi 0, %s53
      %s71 = sphi 0, %s71
      %s73 = sphi 0, %s71
      %s74 = sphi 0, %s73
      %s88 = sphi 0, %s74
      %s94 = sphi 0, %s96
      %s97 = sphi 0, %s94
      %s98 = sphi 0, %s97
      %s114 = sphi 0, %s98
    $region4: #{tpu_custom_call.1} parent=1 // loop_header_branch
      %19 = sbr.rel (%p17) target = $region8
    $region5: #{tpu_custom_call.1} parent=1 // loop_body
      %s21 = ssub.s32 %s16, 1
      %s22 = ssub.s32 %s16, 2
      %s23 = sadd.s32 %s16, 1
      %s24 = ssub.s32 %s16, %s23
      %p25 = scmp.eq.s32.totalorder %s24, 0
      %s27 = sadd.s32 %s26, 1
      %s28 = scalar_select %p25, %s26, %s27
      %p31 = pneg %p25
      %p32 = scmp.eq.s32.totalorder %s16, 1
      %p33 = por %p31, %p32
      %p34 = scmp.ne.s32.totalorder %s26, %s29
      %p35 = scmp.eq.s32.totalorder %s16, 0
      %p36 = por %p34, %p35
      %p37 = scmp.ne.s32.totalorder %s26, %s29
      %p38 = scmp.eq.s32.totalorder %s21, 1
      %p39 = por %p37, %p38
      %p40 = scmp.ne.s32.totalorder %s29, %s30
      %p41 = scmp.eq.s32.totalorder %s21, 0
      %p42 = por %p40, %p41
      %p43 = scmp.ne.s32.totalorder %s29, %s30
      %p44 = scmp.eq.s32.totalorder %s22, 1
      %p45 = por %p43, %p44
      %p47 = scmp.ne.s32.totalorder %s30, %s46
      %p48 = scmp.eq.s32.totalorder %s22, 0
      %p49 = por %p47, %p48
      %s51 = sadd.s32 %s50, 1
      %p54 = scmp.eq.s32.totalorder %s16, 1
      %p55 = scmp.ne.s32.totalorder %s50, %s52
      %p56 = scmp.eq.s32.totalorder %s16, 0
      %p57 = por %p55, %p56
      %p58 = scmp.ne.s32.totalorder %s50, %s52
      %p59 = scmp.eq.s32.totalorder %s21, 1
      %p60 = por %p58, %p59
      %p61 = scmp.ne.s32.totalorder %s52, %s53
      %p62 = scmp.eq.s32.totalorder %s21, 0
      %p63 = por %p61, %p62
      %p64 = scmp.ne.s32.totalorder %s52, %s53
      %p65 = scmp.eq.s32.totalorder %s22, 1
      %p66 = por %p64, %p65
      %p68 = scmp.ne.s32.totalorder %s53, %s67
      %p69 = scmp.eq.s32.totalorder %s22, 0
      %p70 = por %p68, %p69
      %s72 = sadd.s32 %s71, 1
      %p75 = scmp.eq.s32.totalorder %s16, 1
      %p76 = scmp.ne.s32.totalorder %s71, %s73
      %p77 = scmp.eq.s32.totalorder %s16, 0
      %p78 = por %p76, %p77
      %p79 = scmp.ne.s32.totalorder %s71, %s73
      %p80 = scmp.eq.s32.totalorder %s21, 1
      %p81 = por %p79, %p80
      %p82 = scmp.ne.s32.totalorder %s73, %s74
      %p83 = scmp.eq.s32.totalorder %s21, 0
      %p84 = por %p82, %p83
      %p85 = scmp.ne.s32.totalorder %s73, %s74
      %p86 = scmp.eq.s32.totalorder %s22, 1
      %p87 = por %p85, %p86
      %p89 = scmp.ne.s32.totalorder %s74, %s88
      %p90 = scmp.eq.s32.totalorder %s22, 0
      %p91 = por %p89, %p90
      %s92 = ssub.s32 %s16, %s23
      %p93 = scmp.eq.s32.totalorder %s92, 0
      %s95 = sadd.s32 %s94, 1
      %s96 = scalar_select %p93, %s94, %s95
      %p99 = pneg %p93
      %p100 = scmp.eq.s32.totalorder %s16, 1
      %p101 = por %p99, %p100
      %p102 = scmp.ne.s32.totalorder %s94, %s97
      %p103 = scmp.eq.s32.totalorder %s16, 0
      %p104 = por %p102, %p103
      %p105 = scmp.ne.s32.totalorder %s94, %s97
      %p106 = scmp.eq.s32.totalorder %s21, 1
      %p107 = por %p105, %p106
      %p108 = scmp.ne.s32.totalorder %s97, %s98
      %p109 = scmp.eq.s32.totalorder %s21, 0
      %p110 = por %p108, %p109
      %p111 = scmp.ne.s32.totalorder %s97, %s98
      %p112 = scmp.eq.s32.totalorder %s22, 1
      %p113 = por %p111, %p112
      %p115 = scmp.ne.s32.totalorder %s98, %s114
      %p116 = scmp.eq.s32.totalorder %s22, 0
      %p117 = por %p115, %p116
      %p118 = scmp.le.s32.totalorder 1, %s16
      %p119 = scmp.lt.s32.totalorder %s16, 3
      %p120 = pnand %p118, %p119
      %p121 = pneg %p120
      // Predicated region
      $region9: #{tpu_custom_call.1} parent=5 // pred_check
        _
      $region10: #{tpu_custom_call.1} parent=5 // pred_check_branch
        %123 = sbr.rel (%p120) target = $region12
      $region11: #{tpu_custom_call.1} parent=5 // pred_region
        %s124 = ssub.s32 %s16, 1
        // Predicated region
        $region13: #{tpu_custom_call.1} parent=11 // pred_check
          %p125 = pneg %p63
        $region14: #{tpu_custom_call.1} parent=11 // pred_check_branch
          %127 = sbr.rel (%p125) target = $region16
        $region15: #{tpu_custom_call.1} parent=11 // pred_region
          %s129 = ssub.s32 4096, 4096
          %130 = vsyncadd [#allocation6], %s129
          %s131 = sshll.u32 [#allocation5], 4
          %s132 = int_to_ptr.vmem [resolvable:$true] %s131
          %137 = dma.hbm_to_vmem [thread:$0]  %s1, 4096, %s132, [#allocation6], 512, 512, 32
        $region16: #{tpu_custom_call.1} parent=11 // pred_fallthru
          _
        // Predicated region
        $region17: #{tpu_custom_call.1} parent=11 // pred_check
          %p138 = pneg %p84
        $region18: #{tpu_custom_call.1} parent=11 // pred_check_branch
          %140 = sbr.rel (%p138) target = $region20
        $region19: #{tpu_custom_call.1} parent=11 // pred_region
          _
        $region20: #{tpu_custom_call.1} parent=11 // pred_fallthru
          _
      $region12: #{tpu_custom_call.1} parent=5 // pred_fallthru
        _
      %p141 = scmp.lt.s32.totalorder %s16, 2
      // Predicated region
      $region21: #{tpu_custom_call.1} parent=5 // pred_check
        %p142 = pneg %p141
      $region22: #{tpu_custom_call.1} parent=5 // pred_check_branch
        %144 = sbr.rel (%p142) target = $region24
      $region23: #{tpu_custom_call.1} parent=5 // pred_region
        // Predicated region
        $region25: #{tpu_custom_call.1} parent=23 // pred_check
          %p145 = pneg %p36
        $region26: #{tpu_custom_call.1} parent=23 // pred_check_branch
          %147 = sbr.rel (%p145) target = $region28
        $region27: #{tpu_custom_call.1} parent=23 // pred_region
          %s148 = sand.u32 %s26, 1
          %s149 = scalar_lea.sflag [#allocation3], %s148
          %s150 = sand.u32 %s26, 1
          %s151 = smul.addr %s150, 8
          %s152 = scalar_lea.vmem [#allocation2], %s151
          %s154 = ssub.s32 128, 128
          %155 = vsyncadd %s149, %s154
          %s156 = smul.addr %s16, 128
          %s157 = scalar_lea.hbm %s0, %s156
          %s159 = sshll.u32 %s152, 4
          %s160 = int_to_ptr.vmem [resolvable:$true] %s159
          %162 = dma.hbm_to_vmem [thread:$0]  %s157, 128, %s160, %s149
        $region28: #{tpu_custom_call.1} parent=23 // pred_fallthru
          _
      $region24: #{tpu_custom_call.1} parent=5 // pred_fallthru
        _
      %p163 = scmp.le.s32.totalorder 1, %s16
      %p164 = scmp.lt.s32.totalorder %s16, 3
      %p165 = pnand %p163, %p164
      %p166 = pneg %p165
      // Predicated region
      $region29: #{tpu_custom_call.1} parent=5 // pred_check
        _
      $region30: #{tpu_custom_call.1} parent=5 // pred_check_branch
        %168 = sbr.rel (%p165) target = $region32
      $region31: #{tpu_custom_call.1} parent=5 // pred_region
        %s169 = ssub.s32 %s16, 1
        %s170 = sand.u32 %s29, 1
        %s171 = scalar_lea.sflag [#allocation3], %s170
        %s172 = sand.u32 %s29, 1
        %s173 = smul.addr %s172, 8
        %s174 = scalar_lea.vmem [#allocation2], %s173
        // Predicated region
        $region33: #{tpu_custom_call.1} parent=31 // pred_check
          %p175 = pneg %p42
        $region34: #{tpu_custom_call.1} parent=31 // pred_check_branch
          %177 = sbr.rel (%p175) target = $region36
        $region35: #{tpu_custom_call.1} parent=31 // pred_region
          %178 = dma.done %s171, 128
        $region36: #{tpu_custom_call.1} parent=31 // pred_fallthru
          _
        // Predicated region
        $region37: #{tpu_custom_call.1} parent=31 // pred_check
          %p179 = pneg %p63
        $region38: #{tpu_custom_call.1} parent=31 // pred_check_branch
          %181 = sbr.rel (%p179) target = $region40
        $region39: #{tpu_custom_call.1} parent=31 // pred_region
          %182 = dma.done [#allocation6], 4096
        $region40: #{tpu_custom_call.1} parent=31 // pred_fallthru
          _
        %s183 = sand.u32 %s29, 1
        %s184 = scalar_lea.sflag [#allocation3], %s183
        %s185 = sand.u32 %s29, 1
        %s186 = smul.addr %s185, 8
        %s187 = scalar_lea.vmem [#allocation2], %s186
        %p188 = pneg %p42
        %p189 = pneg %p39
        %p190 = pneg %p63
        %p191 = pneg %p60
        %p192 = pneg %p84
        %p193 = pneg %p81
        %p194 = pneg %p110
        %p195 = pneg %p107
        %s196 = sand.u32 %s97, 1
        %s197 = scalar_lea.sflag [#allocation4], %s196
        %s198 = sand.u32 %s97, 1
        %s199 = smul.addr %s198, 32
        %s200 = scalar_lea.vmem [#allocation7], %s199
        %v201 = vld [vmem:[%s174] sm:$0xff]
        %v202 = vld [vmem:[#allocation5] sm:$0xff]
        %v203 = vld [vmem:[#allocation5 + $0x8] sm:$0xff]
        %v204 = vld [vmem:[#allocation5 + $0x10] sm:$0xff]
        %v205 = vld [vmem:[#allocation5 + $0x18] sm:$0xff]
        %v206 = vld [vmem:[#allocation5 + $0x20] sm:$0xff]
        %v207 = vld [vmem:[#allocation5 + $0x28] sm:$0xff]
        %v208 = vld [vmem:[#allocation5 + $0x30] sm:$0xff]
        %v209 = vld [vmem:[#allocation5 + $0x38] sm:$0xff]
        %v210 = vld [vmem:[#allocation5 + $0x40] sm:$0xff]
        %v211 = vld [vmem:[#allocation5 + $0x48] sm:$0xff]
        %v212 = vld [vmem:[#allocation5 + $0x50] sm:$0xff]
        %v213 = vld [vmem:[#allocation5 + $0x58] sm:$0xff]
        %v214 = vld [vmem:[#allocation5 + $0x60] sm:$0xff]
        %v215 = vld [vmem:[#allocation5 + $0x68] sm:$0xff]
        %v216 = vld [vmem:[#allocation5 + $0x70] sm:$0xff]
        %v217 = vld [vmem:[#allocation5 + $0x78] sm:$0xff]
        %v218 = vld [vmem:[#allocation5 + $0x80] sm:$0xff]
        %v219 = vld [vmem:[#allocation5 + $0x88] sm:$0xff]
        %v220 = vld [vmem:[#allocation5 + $0x90] sm:$0xff]
        %v221 = vld [vmem:[#allocation5 + $0x98] sm:$0xff]
        %v222 = vld [vmem:[#allocation5 + $0xa0] sm:$0xff]
        %v223 = vld [vmem:[#allocation5 + $0xa8] sm:$0xff]
        %v224 = vld [vmem:[#allocation5 + $0xb0] sm:$0xff]
        %v225 = vld [vmem:[#allocation5 + $0xb8] sm:$0xff]
        %v226 = vld [vmem:[#allocation5 + $0xc0] sm:$0xff]
        %v227 = vld [vmem:[#allocation5 + $0xc8] sm:$0xff]
        %v228 = vld [vmem:[#allocation5 + $0xd0] sm:$0xff]
        %v229 = vld [vmem:[#allocation5 + $0xd8] sm:$0xff]
        %v230 = vld [vmem:[#allocation5 + $0xe0] sm:$0xff]
        %v231 = vld [vmem:[#allocation5 + $0xe8] sm:$0xff]
        %v232 = vld [vmem:[#allocation5 + $0xf0] sm:$0xff]
        %v233 = vld [vmem:[#allocation5 + $0xf8] sm:$0xff]
        %v234 = vld [vmem:[%s2] sm:$0xf]
        %v236 = vlaneseq
        %v237 = vshrl.u32 %v236, 7
        %v238 = vsub.s32 0, %v237
        %v239 = vrot.slane %v234, %v238
        %v240 = vlaneseq
        %v241 = vshrl.u32 %v240, 7
        %v242 = vsub.s32 1, %v241
        %v243 = vrot.slane %v234, %v242
        %v244 = vlaneseq
        %v245 = vshrl.u32 %v244, 7
        %v246 = vsub.s32 2, %v245
        %v247 = vrot.slane %v234, %v246
        %v248 = vlaneseq
        %v249 = vshrl.u32 %v248, 7
        %v250 = vsub.s32 3, %v249
        %v251 = vrot.slane %v234, %v250
        %vm256 = vcmask 523264
        %v258 = vsel %vm256, %v201, 0
        %260 = vmatprep.subr.mxu0 %v203
        %261 = vmatpush1.msra.mxu0 %v202
        %262 = vmatprep.subr.mxu0 %v207
        %263 = vmatpush1.msra.mxu0 %v206
        %264 = vmatprep.subr.mxu0 %v211
        %265 = vmatpush1.msra.mxu0 %v210
        %266 = vmatprep.subr.mxu0 %v215
        %267 = vmatpush1.msra.mxu0 %v214
        %268 = vmatprep.subr.mxu0 %v219
        %269 = vmatpush1.msra.mxu0 %v218
        %270 = vmatprep.subr.mxu0 %v223
        %271 = vmatpush1.msra.mxu0 %v222
        %272 = vmatprep.subr.mxu0 %v227
        %273 = vmatpush1.msra.mxu0 %v226
        %274 = vmatprep.subr.mxu0 %v231
        %275 = vmatpush1.msra.mxu0 %v230
        %276 = vmatprep.subr.mxu0 0.0
        %277 = vmatpush1.msra.mxu0 0.0
        %278 = vmatprep.subr.mxu0 0.0
        %279 = vmatpush1.msra.mxu0 0.0
        %280 = vmatprep.subr.mxu0 0.0
        %281 = vmatpush1.msra.mxu0 0.0
        %282 = vmatprep.subr.mxu0 0.0
        %283 = vmatpush1.msra.mxu0 0.0
        %284 = vmatprep.subr.mxu0 0.0
        %285 = vmatpush1.msra.mxu0 0.0
        %286 = vmatprep.subr.mxu0 0.0
        %287 = vmatpush1.msra.mxu0 0.0
        %288 = vmatprep.subr.mxu0 0.0
        %289 = vmatpush1.msra.mxu0 0.0
        %290 = vmatprep.subr.mxu0 0.0
        %291 = vmatpush1.msra.mxu0 0.0
        %292 = vmatprep.subr.mxu0 0.0
        %293 = vmatpush1.msra.mxu0 0.0
        %294 = vmatprep.subr.mxu0 0.0
        %295 = vmatpush1.msra.mxu0 0.0
        %296 = vmatprep.subr.mxu0 0.0
        %297 = vmatpush1.msra.mxu0 0.0
        %298 = vmatprep.subr.mxu0 0.0
        %299 = vmatpush1.msra.mxu0 0.0
        %300 = vmatprep.subr.mxu0 0.0
        %301 = vmatpush1.msra.mxu0 0.0
        %302 = vmatprep.subr.mxu0 0.0
        %303 = vmatpush1.msra.mxu0 0.0
        %304 = vmatprep.subr.mxu0 0.0
        %305 = vmatpush1.msra.mxu0 0.0
        %306 = vmatprep.subr.mxu0 0.0
        %307 = vmatpush1.msra.mxu0 0.0
        %308 = vmatprep.subr.mxu0 0.0
        %309 = vmatpush1.msra.mxu0 0.0
        %310 = vmatprep.subr.mxu0 0.0
        %311 = vmatpush1.msra.mxu0 0.0
        %312 = vmatprep.subr.mxu0 0.0
        %313 = vmatpush1.msra.mxu0 0.0
        %314 = vmatprep.subr.mxu0 0.0
        %315 = vmatpush1.msra.mxu0 0.0
        %316 = vmatprep.subr.mxu0 0.0
        %317 = vmatpush1.msra.mxu0 0.0
        %318 = vmatprep.subr.mxu0 0.0
        %319 = vmatpush1.msra.mxu0 0.0
        %320 = vmatprep.subr.mxu0 0.0
        %321 = vmatpush1.msra.mxu0 0.0
        %322 = vmatprep.subr.mxu0 0.0
        %323 = vmatpush1.msra.mxu0 0.0
        %324 = vmatprep.mubr.f32.mxu0 0.0
        %325 = vmatmul.mubr.f32.gmra.mrb[0].mxu0 %v258
        %v326 = vpop.f32.mrb[0].mxu0
        %v327 = vadd.f32 %v239, %v326
        %v328 = vpop.f32.mrb[0].mxu0
        %v329 = vadd.f32 %v243, %v328
        %330 = vdwg.mxu0
        %331 = vmatprep.subr.mxu0 %v205
        %332 = vmatpush1.msra.mxu0 %v204
        %333 = vmatprep.subr.mxu0 %v209
        %334 = vmatpush1.msra.mxu0 %v208
        %335 = vmatprep.subr.mxu0 %v213
        %336 = vmatpush1.msra.mxu0 %v212
        %337 = vmatprep.subr.mxu0 %v217
        %338 = vmatpush1.msra.mxu0 %v216
        %339 = vmatprep.subr.mxu0 %v221
        %340 = vmatpush1.msra.mxu0 %v220
        %341 = vmatprep.subr.mxu0 %v225
        %342 = vmatpush1.msra.mxu0 %v224
        %343 = vmatprep.subr.mxu0 %v229
        %344 = vmatpush1.msra.mxu0 %v228
        %345 = vmatprep.subr.mxu0 %v233
        %346 = vmatpush1.msra.mxu0 %v232
        %347 = vmatprep.subr.mxu0 0.0
        %348 = vmatpush1.msra.mxu0 0.0
        %349 = vmatprep.subr.mxu0 0.0
        %350 = vmatpush1.msra.mxu0 0.0
        %351 = vmatprep.subr.mxu0 0.0
        %352 = vmatpush1.msra.mxu0 0.0
        %353 = vmatprep.subr.mxu0 0.0
        %354 = vmatpush1.msra.mxu0 0.0
        %355 = vmatprep.subr.mxu0 0.0
        %356 = vmatpush1.msra.mxu0 0.0
        %357 = vmatprep.subr.mxu0 0.0
        %358 = vmatpush1.msra.mxu0 0.0
        %359 = vmatprep.subr.mxu0 0.0
        %360 = vmatpush1.msra.mxu0 0.0
        %361 = vmatprep.subr.mxu0 0.0
        %362 = vmatpush1.msra.mxu0 0.0
        %363 = vmatprep.subr.mxu0 0.0
        %364 = vmatpush1.msra.mxu0 0.0
        %365 = vmatprep.subr.mxu0 0.0
        %366 = vmatpush1.msra.mxu0 0.0
        %367 = vmatprep.subr.mxu0 0.0
        %368 = vmatpush1.msra.mxu0 0.0
        %369 = vmatprep.subr.mxu0 0.0
        %370 = vmatpush1.msra.mxu0 0.0
        %371 = vmatprep.subr.mxu0 0.0
        %372 = vmatpush1.msra.mxu0 0.0
        %373 = vmatprep.subr.mxu0 0.0
        %374 = vmatpush1.msra.mxu0 0.0
        %375 = vmatprep.subr.mxu0 0.0
        %376 = vmatpush1.msra.mxu0 0.0
        %377 = vmatprep.subr.mxu0 0.0
        %378 = vmatpush1.msra.mxu0 0.0
        %379 = vmatprep.subr.mxu0 0.0
        %380 = vmatpush1.msra.mxu0 0.0
        %381 = vmatprep.subr.mxu0 0.0
        %382 = vmatpush1.msra.mxu0 0.0
        %383 = vmatprep.subr.mxu0 0.0
        %384 = vmatpush1.msra.mxu0 0.0
        %385 = vmatprep.subr.mxu0 0.0
        %386 = vmatpush1.msra.mxu0 0.0
        %387 = vmatprep.subr.mxu0 0.0
        %388 = vmatpush1.msra.mxu0 0.0
        %389 = vmatprep.subr.mxu0 0.0
        %390 = vmatpush1.msra.mxu0 0.0
        %391 = vmatprep.subr.mxu0 0.0
        %392 = vmatpush1.msra.mxu0 0.0
        %393 = vmatprep.subr.mxu0 0.0
        %394 = vmatpush1.msra.mxu0 0.0
        %395 = vmatprep.mubr.f32.mxu0 0.0
        %396 = vmatmul.mubr.f32.gmra.mrb[0].mxu0 %v258
        %v397 = vpop.f32.mrb[0].mxu0
        %v398 = vadd.f32 %v247, %v397
        %v399 = vpop.f32.mrb[0].mxu0
        %v400 = vadd.f32 %v251, %v399
        %401 = vdwg.mxu0
        %v402 = vmax.f32 %v327, %v329
        %v403 = vmax.f32 %v398, %v400
        %v404 = vmax.f32 %v402, %v403
        %405 = vmax.xlane.f32.xlu0 %v404
        %v406 = vpop.xlane.xlu0 %405
        %v407 = vsub.f32 %v327, %v406
        %v408 = vsub.f32 %v329, %v406
        %v409 = vsub.f32 %v398, %v406
        %v410 = vsub.f32 %v400, %v406
        %v411 = vmul.f32 %v407, 1.442695
        %v412 = vpow.pop %v411
        %v413 = vmul.f32 %v408, 1.442695
        %v414 = vpow.pop %v413
        %v415 = vmul.f32 %v409, 1.442695
        %v416 = vpow.pop %v415
        %v417 = vmul.f32 %v410, 1.442695
        %v418 = vpow.pop %v417
        %v419 = vadd.f32 %v412, %v414
        %v420 = vadd.f32 %v419, %v416
        %v421 = vadd.f32 %v420, %v418
        %422 = vadd.xlane.f32.xlu0 %v421
        %v423 = vpop.xlane.xlu0 %422
        %v424 = vlog2.pop %v423
        %v425 = vmul.f32 %v424, 0.6931472
        %v426 = vsub.f32 %v407, %v425
        %v427 = vsub.f32 %v408, %v425
        %v428 = vsub.f32 %v409, %v425
        %v429 = vsub.f32 %v410, %v425
        %430 = vst [vmem:[%s200] sm:$0xff] %v426
        %431 = vst [vmem:[%s200 + $0x8] sm:$0xff] %v427
        %432 = vst [vmem:[%s200 + $0x10] sm:$0xff] %v428
        %433 = vst [vmem:[%s200 + $0x18] sm:$0xff] %v429
        %s434 = sand.u32 %s97, 1
        %s435 = scalar_lea.sflag [#allocation4], %s434
        %s436 = sand.u32 %s97, 1
        %s437 = smul.addr %s436, 32
        %s438 = scalar_lea.vmem [#allocation7], %s437
        // Predicated region
        $region41: #{tpu_custom_call.1} parent=31 // pred_check
          %p439 = pneg %p107
        $region42: #{tpu_custom_call.1} parent=31 // pred_check_branch
          %441 = sbr.rel (%p439) target = $region44
        $region43: #{tpu_custom_call.1} parent=31 // pred_region
          %s443 = ssub.s32 512, 512
          %444 = vsyncadd %s435, %s443
          %s445 = smul.addr %s21, 4
          %s446 = smul.addr %s445, 128
          %s447 = scalar_lea.hbm %s3, %s446
          %s449 = sshll.u32 %s438, 4
          %s450 = int_to_ptr.vmem [resolvable:$true] %s449
          %452 = dma.vmem_to_hbm [thread:$0]  %s450, 512, %s447, %s435
        $region44: #{tpu_custom_call.1} parent=31 // pred_fallthru
          _
      $region32: #{tpu_custom_call.1} parent=5 // pred_fallthru
        _
      %p453 = scmp.le.s32.totalorder 2, %s16
      // Predicated region
      $region45: #{tpu_custom_call.1} parent=5 // pred_check
        %p454 = pneg %p453
      $region46: #{tpu_custom_call.1} parent=5 // pred_check_branch
        %456 = sbr.rel (%p454) target = $region48
      $region47: #{tpu_custom_call.1} parent=5 // pred_region
        %s457 = ssub.s32 %s16, 2
        // Predicated region
        $region49: #{tpu_custom_call.1} parent=47 // pred_check
          %p458 = pneg %p113
        $region50: #{tpu_custom_call.1} parent=47 // pred_check_branch
          %460 = sbr.rel (%p458) target = $region52
        $region51: #{tpu_custom_call.1} parent=47 // pred_region
          %s461 = sand.u32 %s98, 1
          %s462 = scalar_lea.sflag [#allocation4], %s461
          %s463 = sand.u32 %s98, 1
          %s464 = smul.addr %s463, 32
          %s465 = scalar_lea.vmem [#allocation7], %s464
          %466 = dma.done %s462, 512
        $region52: #{tpu_custom_call.1} parent=47 // pred_fallthru
          _
      $region48: #{tpu_custom_call.1} parent=5 // pred_fallthru
        _
    $region6: #{tpu_custom_call.1} parent=1 // loop_footer
      %s20 = sadd.s32 1, %s16
    $region7: #{tpu_custom_call.1} parent=1 // loop_footer_branch
      %15 = sbr.rel target = $region3
    $region8: #{tpu_custom_call.1} parent=1 // loop_exit
      _
    %467 = vsyncpa [#allocation3], 1
    %s468 = scalar_lea.sflag [#allocation3], 1
    %469 = vsyncpa %s468, 1
    %470 = vsyncpa [#allocation6], 1
    %471 = vsyncpa [#allocation4], 1
    %s472 = scalar_lea.sflag [#allocation4], 1
    %473 = vsyncpa %s472, 1

</llo_original>
